<compile_context>
chip_gen: v7x
topology: tpu7x:2x2x1
jax: 0.10.0
libtpu: 0.0.40
codegen_flags: <defaults>
</compile_context>

<pallas_src>
import functools

import jax
import jax.numpy as jnp
from jax.experimental import pallas as pl
from jax.experimental.pallas import tpu as pltpu


def _round_up(x, m):
    return (x + m - 1) // m * m


def _ceil_div(a, b):
    return -(-a // b)


# ------------------------- parameter packing -------------------------

def pack_params(params, *, hidden_dim, use_rnn=True):
    """Packs all weights/biases ONCE into a single (ROWS, LANES) f32 slab.

    The matmul fusions are baked in at pack time:
      w1 = blockdiag(w_obs, w_fc1, w_hh)  + bias row (hit by the 1-lane)
      w2 = [w_ih_emb | w_a1],  b2 = [b_ih | b_a1]
      w3 = blockdiag(w_ih_x, w_a2)
      w4 = w_fc2 zero-padded to fill the 128-lane output slab, b4 likewise.
    Returns (slab, meta).
    """
    H = hidden_dim
    f32 = jnp.float32
    w_obs = jnp.asarray(params["w_obs"], f32)   # (obs_in, E)
    b_obs = jnp.asarray(params["b_obs"], f32)   # (1, E)
    w_a1 = jnp.asarray(params["w_a1"], f32)     # (E, H)
    b_a1 = jnp.asarray(params["b_a1"], f32)
    w_a2 = jnp.asarray(params["w_a2"], f32)     # (H, H)
    b_a2 = jnp.asarray(params["b_a2"], f32)
    w_fc1 = jnp.asarray(params["w_fc1"], f32)   # (input_shape, H)
    b_fc1 = jnp.asarray(params["b_fc1"], f32)
    w_ih = jnp.asarray(params["w_ih"], f32)     # (H + E, G)
    b_ih = jnp.asarray(params["b_ih"], f32)     # (1, G)
    w_fc2 = jnp.asarray(params["w_fc2"], f32)   # (H, A)
    b_fc2 = jnp.asarray(params["b_fc2"], f32)   # (1, A)

    obs_in, E = w_obs.shape
    in_dim = w_fc1.shape[0]
    G = w_ih.shape[1]                 # 3H (GRU) or H (Linear "rnn")
    A = w_fc2.shape[1]

    w_ih_x = w_ih[:H]                 # rows consumed by x = relu(fc1)
    w_ih_emb = w_ih[H:]               # rows consumed by the obs embedding

    # Lane layout of the fused input slab: [obs | inp | h | 1 | zero-pad].
    obs_off = 0
    inp_off = obs_in
    h_off = inp_off + in_dim
    one_off = h_off + H
    in_lanes = _round_up(one_off + 1, 128)

    # ---- push 1: block-diag first layer (biases folded via the 1-lane) ----
    n1 = E + H + (G if use_rnn else 0)
    w1 = jnp.zeros((in_lanes, n1), f32)
    w1 = w1.at[obs_off:obs_off + obs_in, 0:E].set(w_obs)
    w1 = w1.at[inp_off:inp_off + in_dim, E:E + H].set(w_fc1)
    w1 = w1.at[one_off, 0:E].set(b_obs[0])
    w1 = w1.at[one_off, E:E + H].set(b_fc1[0])
    if use_rnn:
        w_hh = jnp.asarray(params["w_hh"], f32)
        b_hh = jnp.asarray(params["b_hh"], f32)
        w1 = w1.at[h_off:h_off + H, E + H:E + H + G].set(w_hh)
        w1 = w1.at[one_off, E + H:E + H + G].set(b_hh[0])

    # ---- push 2: fused emb-side matmul (shared LHS `emb`) ----
    w2 = jnp.concatenate([w_ih_emb, w_a1], axis=1)      # (E, G + H)
    b2 = jnp.concatenate([b_ih, b_a1], axis=1)          # (1, G + H)

    # ---- push 3: block-diag [w_ih_x | w_a2] ----
    w3 = jnp.zeros((2 * H, G + H), f32)
    w3 = w3.at[0:H, 0:G].set(w_ih_x)
    w3 = w3.at[H:2 * H, G:G + H].set(w_a2)

    # ---- push 4: w_fc2 zero-padded so the output slab is exactly lane-dense
    out_w = _round_up(2 * H + A, 128)
    q_pad = out_w - 2 * H
    w4 = jnp.zeros((H, q_pad), f32).at[:, 0:A].set(w_fc2)
    b4 = jnp.zeros((1, q_pad), f32).at[:, 0:A].set(b_fc2)

    blocks = [("w1", w1), ("w2", w2), ("w3", w3), ("w4", w4),
              ("b2", b2), ("b_a2", b_a2), ("b4", b4)]

    lanes = 128
    for _, arr in blocks:
        lanes = max(lanes, _round_up(arr.shape[1], 128))

    layout = {}
    row = 0
    for name, arr in blocks:
        nr, nc = arr.shape
        layout[name] = (row, nr, nc)
        row += _round_up(nr, 8)       # every block (incl. bias rows) 8-aligned
    total_rows = _round_up(row, 8)

    slab = jnp.zeros((total_rows, lanes), f32)
    for name, arr in blocks:
        r0, nr, nc = layout[name]
        slab = slab.at[r0:r0 + nr, 0:nc].set(arr)

    meta = dict(layout=layout, hidden_dim=H, obs_emb_dim=E, gate_dim=G,
                n_actions=A, obs_in=obs_in, input_dim=in_dim,
                obs_off=obs_off, inp_off=inp_off, h_off=h_off,
                one_off=one_off, in_lanes=in_lanes, out_w=out_w,
                use_rnn=use_rnn)
    return slab, meta


# ------------------------- Pallas kernel -------------------------

def _agent_fwd_kernel(in_ref, p_ref, out_ref, *, meta, use_l1norm):
    f32 = jnp.float32
    H = meta["hidden_dim"]
    E = meta["obs_emb_dim"]
    G = meta["gate_dim"]
    use_rnn = meta["use_rnn"]
    layout = meta["layout"]

    def p(name):                       # static slice of the resident param slab
        r0, nr, nc = layout[name]
        return p_ref[r0:r0 + nr, 0:nc]

    slab = in_ref[...]                 # (TB, in_lanes) fused [obs|inp|h|1|pad]

    # ---- push 1: blockdiag(w_obs, w_fc1, w_hh), biases via the 1-lane ----
    r1 = jnp.dot(slab, p("w1"), preferred_element_type=f32)
    emb = r1[:, 0:E]                                   # obs_fc output
    if use_l1norm:
        denom = jnp.maximum(jnp.mean(jnp.abs(emb), axis=-1, keepdims=True),
                            1e-8)
        emb = emb * pl.reciprocal(denom, approx=True)
    x = jnp.maximum(r1[:, E:E + H], 0.0)               # relu(fc1(inputs))

    # ---- push 2: emb @ [w_ih_emb | w_a1] + [b_ih | b_a1] ----
    r2 = jnp.dot(emb, p("w2"), preferred_element_type=f32) + p("b2")
    gi_emb = r2[:, 0:G]
    a1 = jnp.maximum(r2[:, G:G + H], 0.0)

    # ---- push 3: [x | a1] @ blockdiag(w_ih_x, w_a2) ----
    r3 = jnp.dot(jnp.concatenate([x, a1], axis=1), p("w3"),
                 preferred_element_type=f32)
    gi = r3[:, 0:G] + gi_emb                           # xcat @ w_ih + b_ih
    aux = r3[:, G:G + H] + p("b_a2")                   # auxiliary head output

    # ---- recurrent cell ----
    if use_rnn:
        gh = r1[:, E + H:E + H + G]                    # h @ w_hh + b_hh
        h_in = slab[:, meta["h_off"]:meta["h_off"] + H]
        r = jax.nn.sigmoid(gi[:, 0:H] + gh[:, 0:H])
        z = jax.nn.sigmoid(gi[:, H:2 * H] + gh[:, H:2 * H])
        n = jnp.tanh(gi[:, 2 * H:3 * H] + r * gh[:, 2 * H:3 * H])
        h = (1.0 - z) * n + z * h_in
    else:
        h = jnp.maximum(gi, 0.0)                       # Linear "rnn" path

    # ---- push 4: q, zero-padded to fill the lane-dense output slab ----
    q_pad = jnp.dot(h, p("w4"), preferred_element_type=f32) + p("b4")

    # lane-dense fused output [aux | h | q | 0-pad] : single unmasked store
    out_ref[...] = jnp.concatenate([aux, h, q_pad], axis=1)


# ------------------------- wrapper -------------------------

def contrastive_rnn_agent_forward(observations, inputs, hidden_state,
                                  param_slab, meta, *, use_l1norm=True):
    """Full forward pass; returns (q, h, aux_h) like the PyTorch module."""
    H = meta["hidden_dim"]
    A = meta["n_actions"]
    B = inputs.shape[0]
    h_in = hidden_state.reshape(-1, H).astype(jnp.float32)
    obs = observations.astype(jnp.float32)
    inp = inputs.astype(jnp.float32)

    # Batch tiling: derive the tile from ceil(B / n_tiles) so padding stays
    # minimal, cap at 512, and guarantee >=2 grid steps whenever B >= 16 so
    # both v7x TensorCores get work on the "parallel" axis.
    B8 = _round_up(max(B, 1), 8)
    max_tb = 512
    n_tiles = max(2 if B8 >= 16 else 1, _ceil_div(B8, max_tb))
    TB = _round_up(_ceil_div(B8, n_tiles), 8)
    Bp = TB * n_tiles

    # Fused lane-dense input slab [obs | inp | h | 1 | 0-pad]: one DMA/tile.
    in_lanes = meta["in_lanes"]
    slab = jnp.zeros((Bp, in_lanes), jnp.float32)
    slab = slab.at[:B, meta["obs_off"]:meta["obs_off"] + obs.shape[1]].set(obs)
    slab = slab.at[:B, meta["inp_off"]:meta["inp_off"] + inp.shape[1]].set(inp)
    slab = slab.at[:B, meta["h_off"]:meta["h_off"] + H].set(h_in)
    slab = slab.at[:, meta["one_off"]].set(1.0)

    out_w = meta["out_w"]
    kernel = functools.partial(_agent_fwd_kernel, meta=meta,
                               use_l1norm=use_l1norm)

    out = pl.pallas_call(
        kernel,
        out_shape=jax.ShapeDtypeStruct((Bp, out_w), jnp.float32),
        grid=(Bp // TB,),
        in_specs=[
            pl.BlockSpec((TB, in_lanes), lambda i: (i, 0)),
            # Parameter slab: constant index map -> resident across tiles.
            pl.BlockSpec(param_slab.shape, lambda i: (0, 0)),
        ],
        out_specs=pl.BlockSpec((TB, out_w), lambda i: (i, 0)),
        compiler_params=pltpu.CompilerParams(
            dimension_semantics=("parallel",)),
    )(slab, param_slab)

    aux_h = out[:B, 0:H]
    h = out[:B, H:2 * H]
    q = out[:B, 2 * H:2 * H + A]
    return q, h, aux_h


# ------------------------- pure-JAX reference -------------------------

def _reference_forward(observations, inputs, hidden_state, p,
                       *, hidden_dim, use_l1norm=True, use_rnn=True):
    def avg_l1_norm(x, eps=1e-8):
        return x / jnp.maximum(jnp.mean(jnp.abs(x), axis=-1, keepdims=True), eps)

    emb = observations @ p["w_obs"] + p["b_obs"]
    if use_l1norm:
        emb = avg_l1_norm(emb)
    a1 = jnp.maximum(emb @ p["w_a1"] + p["b_a1"], 0.0)
    aux = a1 @ p["w_a2"] + p["b_a2"]
    x = jnp.maximum(inputs @ p["w_fc1"] + p["b_fc1"], 0.0)
    xcat = jnp.concatenate([x, emb], axis=1)
    h_in = hidden_state.reshape(-1, hidden_dim)
    H = hidden_dim
    if use_rnn:
        gi = xcat @ p["w_ih"] + p["b_ih"]
        gh = h_in @ p["w_hh"] + p["b_hh"]
        r = jax.nn.sigmoid(gi[:, :H] + gh[:, :H])
        z = jax.nn.sigmoid(gi[:, H:2 * H] + gh[:, H:2 * H])
        n = jnp.tanh(gi[:, 2 * H:] + r * gh[:, 2 * H:])
        h = (1.0 - z) * n + z * h_in
    else:
        h = jnp.maximum(xcat @ p["w_ih"] + p["b_ih"], 0.0)
    q = h @ p["w_fc2"] + p["b_fc2"]
    return q, h, aux


# ------------------------- main -------------------------

if __name__ == "__main__":
    # synthetic config (matches the module's constructor semantics)
    n_agents = 4
    obs_dim = 12
    obs_in = obs_dim + n_agents          # 16
    obs_emb_dim = 32                     # observation_embedding_dim
    hidden_dim = 32
    input_shape = 24
    n_actions = 8
    rnn_dim = obs_emb_dim + hidden_dim   # 64
    B = 8

    key = jax.random.PRNGKey(0)
    ks = jax.random.split(key, 20)

    def uinit(k, shape, fan_in):
        bound = 1.0 / jnp.sqrt(float(fan_in))
        return jax.random.uniform(k, shape, jnp.float32, -bound, bound)

    params = {
        "w_obs": uinit(ks[0], (obs_in, obs_emb_dim), obs_in),
        "b_obs": uinit(ks[1], (1, obs_emb_dim), obs_in),
        "w_a1": uinit(ks[2], (obs_emb_dim, hidden_dim), obs_emb_dim),
        "b_a1": uinit(ks[3], (1, hidden_dim), obs_emb_dim),
        "w_a2": uinit(ks[4], (hidden_dim, hidden_dim), hidden_dim),
        "b_a2": uinit(ks[5], (1, hidden_dim), hidden_dim),
        "w_fc1": uinit(ks[6], (input_shape, hidden_dim), input_shape),
        "b_fc1": uinit(ks[7], (1, hidden_dim), input_shape),
        "w_ih": uinit(ks[8], (rnn_dim, 3 * hidden_dim), hidden_dim),
        "b_ih": uinit(ks[9], (1, 3 * hidden_dim), hidden_dim),
        "w_hh": uinit(ks[10], (hidden_dim, 3 * hidden_dim), hidden_dim),
        "b_hh": uinit(ks[11], (1, 3 * hidden_dim), hidden_dim),
        "w_fc2": uinit(ks[12], (hidden_dim, n_actions), hidden_dim),
        "b_fc2": uinit(ks[13], (1, n_actions), hidden_dim),
    }

    observations = jax.random.normal(ks[14], (B, obs_in), jnp.float32)
    inputs = jax.random.normal(ks[15], (B, input_shape), jnp.float32)
    hidden_state = jax.random.normal(ks[16], (B, hidden_dim), jnp.float32)

    # Pack parameters ONCE (outside the per-step forward).
    param_slab, meta = pack_params(params, hidden_dim=hidden_dim, use_rnn=True)

    q, h, aux_h = contrastive_rnn_agent_forward(
        observations, inputs, hidden_state, param_slab, meta,
        use_l1norm=True)
    jax.block_until_ready((q, h, aux_h))

    q_ref, h_ref, aux_ref = _reference_forward(
        observations, inputs, hidden_state, params,
        hidden_dim=hidden_dim, use_l1norm=True, use_rnn=True)

    assert q.shape == (B, n_actions)
    assert h.shape == (B, hidden_dim)
    assert aux_h.shape == (B, hidden_dim)
    # approx reciprocal in the l1-norm has ~2^-12 relative error -> 2e-3 tol.
    assert jnp.allclose(q, q_ref, atol=2e-3, rtol=2e-3)
    assert jnp.allclose(h, h_ref, atol=2e-3, rtol=2e-3)
    assert jnp.allclose(aux_h, aux_ref, atol=2e-3, rtol=2e-3)

    print("KERNEL_OK")
</pallas_src>

<mosaic_0001>
module attributes {stable_mosaic.version = 11 : i64} {
  func.func @_agent_fwd_kernel(%arg0: i32, %arg1: memref<8x128xf32, #tpu.memory_space<vmem>>, %arg2: memref<280x256xf32, #tpu.memory_space<vmem>>, %arg3: memref<8x128xf32, #tpu.memory_space<vmem>>) attributes {dimension_semantics = [#tpu.dimension_semantics<parallel>], iteration_bounds = array<i64: 1>, scalar_prefetch = 0 : i64, scratch_operands = 0 : i64, tpu.core_type = #tpu.core_type<tc>, window_params = [{transform_indices = @transform_0, window_bounds = array<i64: 8, 128>}, {pipeline_mode = #tpu.pipeline_mode<synchronous>, transform_indices = @transform_1, window_bounds = array<i64: 280, 256>}, {transform_indices = @transform_2, window_bounds = array<i64: 8, 128>}]} {
    %c0 = arith.constant 0 : index
    %c0_0 = arith.constant 0 : index
    %0 = vector.load %arg1[%c0, %c0_0] : memref<8x128xf32, #tpu.memory_space<vmem>>, vector<8x128xf32>
    %c0_1 = arith.constant 0 : index
    %c0_2 = arith.constant 0 : index
    %1 = vector.load %arg2[%c0_1, %c0_2] : memref<280x256xf32, #tpu.memory_space<vmem>>, vector<128x160xf32>
    %cst = arith.constant dense<0.000000e+00> : vector<8x160xf32>
    %2 = tpu.matmul %0, %1, %cst {dimension_numbers = #tpu.dot_dimension_numbers<[1], [0], [0], [1], [0, 0, 1, 1], [], []>} : vector<8x128xf32>, vector<128x160xf32>, vector<8x160xf32> -> vector<8x160xf32>
    %3 = vector.extract_strided_slice %2 {offsets = [0, 0], sizes = [8, 32], strides = [1, 1]} : vector<8x160xf32> to vector<8x32xf32>
    %4 = math.absf %3 : vector<8x32xf32>
    %cst_3 = arith.constant dense<0.000000e+00> : vector<8xf32>
    %5 = vector.multi_reduction <add>, %4, %cst_3 [1] : vector<8x32xf32> to vector<8xf32>
    %6 = vector.shape_cast %5 : vector<8xf32> to vector<8x1xf32>
    %cst_4 = arith.constant 3.200000e+01 : f32
    %7 = vector.broadcast %cst_4 : f32 to vector<8x1xf32>
    %8 = arith.divf %6, %7 : vector<8x1xf32>
    %cst_5 = arith.constant 9.99999993E-9 : f32
    %9 = vector.broadcast %cst_5 : f32 to vector<8x1xf32>
    %10 = arith.maximumf %8, %9 : vector<8x1xf32>
    %11 = tpu.reciprocal %10 {approx = true} : vector<8x1xf32> -> vector<8x1xf32>
    %12 = vector.broadcast %11 : vector<8x1xf32> to vector<8x32xf32>
    %13 = arith.mulf %3, %12 : vector<8x32xf32>
    %14 = vector.extract_strided_slice %2 {offsets = [0, 32], sizes = [8, 32], strides = [1, 1]} : vector<8x160xf32> to vector<8x32xf32>
    %cst_6 = arith.constant 0.000000e+00 : f32
    %15 = vector.broadcast %cst_6 : f32 to vector<8x32xf32>
    %16 = arith.maximumf %14, %15 : vector<8x32xf32>
    %c128 = arith.constant 128 : index
    %c0_7 = arith.constant 0 : index
    %17 = vector.load %arg2[%c128, %c0_7] : memref<280x256xf32, #tpu.memory_space<vmem>>, vector<32x128xf32>
    %cst_8 = arith.constant dense<0.000000e+00> : vector<8x128xf32>
    %18 = tpu.matmul %13, %17, %cst_8 {dimension_numbers = #tpu.dot_dimension_numbers<[1], [0], [0], [1], [0, 0, 1, 1], [], []>} : vector<8x32xf32>, vector<32x128xf32>, vector<8x128xf32> -> vector<8x128xf32>
    %c256 = arith.constant 256 : index
    %c0_9 = arith.constant 0 : index
    %19 = vector.load %arg2[%c256, %c0_9] : memref<280x256xf32, #tpu.memory_space<vmem>>, vector<1x128xf32>
    %20 = vector.broadcast %19 : vector<1x128xf32> to vector<8x128xf32>
    %21 = arith.addf %18, %20 : vector<8x128xf32>
    %22 = vector.extract_strided_slice %21 {offsets = [0, 0], sizes = [8, 96], strides = [1, 1]} : vector<8x128xf32> to vector<8x96xf32>
    %23 = vector.extract_strided_slice %21 {offsets = [0, 96], sizes = [8, 32], strides = [1, 1]} : vector<8x128xf32> to vector<8x32xf32>
    %cst_10 = arith.constant 0.000000e+00 : f32
    %24 = vector.broadcast %cst_10 : f32 to vector<8x32xf32>
    %25 = arith.maximumf %23, %24 : vector<8x32xf32>
    %26 = tpu.concatenate %16, %25 in 1 : vector<8x32xf32>, vector<8x32xf32> -> vector<8x64xf32>
    %c160 = arith.constant 160 : index
    %c0_11 = arith.constant 0 : index
    %27 = vector.load %arg2[%c160, %c0_11] : memref<280x256xf32, #tpu.memory_space<vmem>>, vector<64x128xf32>
    %cst_12 = arith.constant dense<0.000000e+00> : vector<8x128xf32>
    %28 = tpu.matmul %26, %27, %cst_12 {dimension_numbers = #tpu.dot_dimension_numbers<[1], [0], [0], [1], [0, 0, 1, 1], [], []>} : vector<8x64xf32>, vector<64x128xf32>, vector<8x128xf32> -> vector<8x128xf32>
    %29 = vector.extract_strided_slice %28 {offsets = [0, 0], sizes = [8, 96], strides = [1, 1]} : vector<8x128xf32> to vector<8x96xf32>
    %30 = arith.addf %29, %22 : vector<8x96xf32>
    %31 = vector.extract_strided_slice %28 {offsets = [0, 96], sizes = [8, 32], strides = [1, 1]} : vector<8x128xf32> to vector<8x32xf32>
    %c264 = arith.constant 264 : index
    %c0_13 = arith.constant 0 : index
    %32 = vector.load %arg2[%c264, %c0_13] : memref<280x256xf32, #tpu.memory_space<vmem>>, vector<1x32xf32>
    %33 = vector.broadcast %32 : vector<1x32xf32> to vector<8x32xf32>
    %34 = arith.addf %31, %33 : vector<8x32xf32>
    %35 = vector.extract_strided_slice %2 {offsets = [0, 64], sizes = [8, 96], strides = [1, 1]} : vector<8x160xf32> to vector<8x96xf32>
    %36 = vector.extract_strided_slice %0 {offsets = [0, 40], sizes = [8, 32], strides = [1, 1]} : vector<8x128xf32> to vector<8x32xf32>
    %37 = vector.extract_strided_slice %30 {offsets = [0, 0], sizes = [8, 32], strides = [1, 1]} : vector<8x96xf32> to vector<8x32xf32>
    %38 = vector.extract_strided_slice %35 {offsets = [0, 0], sizes = [8, 32], strides = [1, 1]} : vector<8x96xf32> to vector<8x32xf32>
    %39 = arith.addf %37, %38 : vector<8x32xf32>
    %40 = arith.negf %39 : vector<8x32xf32>
    %41 = math.exp %40 : vector<8x32xf32>
    %cst_14 = arith.constant 1.000000e+00 : f32
    %42 = vector.broadcast %cst_14 : f32 to vector<8x32xf32>
    %43 = arith.addf %42, %41 : vector<8x32xf32>
    %44 = arith.divf %42, %43 : vector<8x32xf32>
    %45 = vector.extract_strided_slice %30 {offsets = [0, 32], sizes = [8, 32], strides = [1, 1]} : vector<8x96xf32> to vector<8x32xf32>
    %46 = vector.extract_strided_slice %35 {offsets = [0, 32], sizes = [8, 32], strides = [1, 1]} : vector<8x96xf32> to vector<8x32xf32>
    %47 = arith.addf %45, %46 : vector<8x32xf32>
    %48 = arith.negf %47 : vector<8x32xf32>
    %49 = math.exp %48 : vector<8x32xf32>
    %cst_15 = arith.constant 1.000000e+00 : f32
    %50 = vector.broadcast %cst_15 : f32 to vector<8x32xf32>
    %51 = arith.addf %50, %49 : vector<8x32xf32>
    %52 = arith.divf %50, %51 : vector<8x32xf32>
    %53 = vector.extract_strided_slice %30 {offsets = [0, 64], sizes = [8, 32], strides = [1, 1]} : vector<8x96xf32> to vector<8x32xf32>
    %54 = vector.extract_strided_slice %35 {offsets = [0, 64], sizes = [8, 32], strides = [1, 1]} : vector<8x96xf32> to vector<8x32xf32>
    %55 = arith.mulf %44, %54 : vector<8x32xf32>
    %56 = arith.addf %53, %55 : vector<8x32xf32>
    %57 = math.tanh %56 : vector<8x32xf32>
    %cst_16 = arith.constant 1.000000e+00 : f32
    %58 = vector.broadcast %cst_16 : f32 to vector<8x32xf32>
    %59 = arith.subf %58, %52 : vector<8x32xf32>
    %60 = arith.mulf %59, %57 : vector<8x32xf32>
    %61 = arith.mulf %52, %36 : vector<8x32xf32>
    %62 = arith.addf %60, %61 : vector<8x32xf32>
    %c224 = arith.constant 224 : index
    %c0_17 = arith.constant 0 : index
    %63 = vector.load %arg2[%c224, %c0_17] : memref<280x256xf32, #tpu.memory_space<vmem>>, vector<32x64xf32>
    %cst_18 = arith.constant dense<0.000000e+00> : vector<8x64xf32>
    %64 = tpu.matmul %62, %63, %cst_18 {dimension_numbers = #tpu.dot_dimension_numbers<[1], [0], [0], [1], [0, 0, 1, 1], [], []>} : vector<8x32xf32>, vector<32x64xf32>, vector<8x64xf32> -> vector<8x64xf32>
    %c272 = arith.constant 272 : index
    %c0_19 = arith.constant 0 : index
    %65 = vector.load %arg2[%c272, %c0_19] : memref<280x256xf32, #tpu.memory_space<vmem>>, vector<1x64xf32>
    %66 = vector.broadcast %65 : vector<1x64xf32> to vector<8x64xf32>
    %67 = arith.addf %64, %66 : vector<8x64xf32>
    %68 = tpu.concatenate %34, %62, %67 in 1 : vector<8x32xf32>, vector<8x32xf32>, vector<8x64xf32> -> vector<8x128xf32>
    %c0_20 = arith.constant 0 : index
    %c0_21 = arith.constant 0 : index
    %69 = vector.load %arg3[%c0_20, %c0_21] : memref<8x128xf32, #tpu.memory_space<vmem>>, vector<8x128xf32>
    tpu.vector_store %arg3[%c0_20, %c0_21], %68 {strides = array<i32>} : memref<8x128xf32, #tpu.memory_space<vmem>>, vector<8x128xf32>,
    return
  }
  func.func @transform_0(%arg0: i32) -> (i32, i32) {
    %c0_i32 = arith.constant 0 : i32
    %c0_i32_0 = arith.constant 0 : i32
    return %arg0, %c0_i32 : i32, i32
  }
  func.func @transform_1(%arg0: i32) -> (i32, i32) {
    %c0_i32 = arith.constant 0 : i32
    %c0_i32_0 = arith.constant 0 : i32
    %c0_i32_1 = arith.constant 0 : i32
    return %c0_i32, %c0_i32_0 : i32, i32
  }
  func.func @transform_2(%arg0: i32) -> (i32, i32) {
    %c0_i32 = arith.constant 0 : i32
    %c0_i32_0 = arith.constant 0 : i32
    return %arg0, %c0_i32 : i32, i32
  }
}

</mosaic_0001>

<llo_original>
// kernel: tpu_custom_call.1
$region0: #{tpu_custom_call.1}
  #allocation0 [shape = 'u32[]', space=smem, size = 0x4, offset = 0x4, fixed_abs, tag = 'smem constant byte address 0x4 - core index']
  #allocation1 [shape = 'u32[144,128]{1,0:T(1,128)}', space=vmem, size = 0x12000, scoped, tag = 'internal scratch']
  %s0 = inlined_call_operand.hbm [shape: f32[8,128], index: 0, kind: input, shape index: {}]
  %s1 = inlined_call_operand.hbm [shape: f32[280,256], index: 1, kind: input, shape index: {}]
  %s2 = inlined_call_operand.hbm [shape: f32[8,128], index: 2, kind: output, shape index: {}]
  %s3 = sld [smem:[#allocation0]]
  $region26: #{tpu_custom_call.1} parent=0
    _
  %s5 = ssub.s32 1, %s3
  %s6 = scalar_select 0, %s5, %s3
  $region1: #{tpu_custom_call.1} parent=0
    #allocation2 [shape = 'u8[4096]{0}', space=vmem, size = 0x1000, scoped, tag = 'input window, operand 0, single buffered']
    #allocation3 [shape = 's32[1]{0}', space=sflag, size = 0x4, scoped, tag = 'scoped memory for tpu_custom_call.1']
    #allocation4 [shape = 's32[1]{0}', space=sflag, size = 0x4, scoped, tag = 'scoped memory for tpu_custom_call.1']
    #allocation5 [shape = 'u8[286720]{0}', space=vmem, size = 0x46000, scoped, tag = 'input window, operand 1, single buffered']
    #allocation6 [shape = 's32[1]{0}', space=sflag, size = 0x4, scoped, tag = 'scoped memory for tpu_custom_call.1']
    #allocation7 [shape = 'u8[4096]{0}', space=vmem, size = 0x1000, scoped, tag = 'output window, operand 0, single buffered']
    %7 = vsyncpa [#allocation3], 0
    %8 = vsyncpa [#allocation6], 0
    %9 = vsyncpa [#allocation4], 0
    // Predicated region
    $region2: #{tpu_custom_call.1} parent=1 // pred_check
      _
    $region3: #{tpu_custom_call.1} parent=1 // pred_check_branch
      %11 = sbr.rel (0) target = $region5
    $region4: #{tpu_custom_call.1} parent=1 // pred_region
      %s13 = ssub.s32 128, 128
      %14 = vsyncadd [#allocation3], %s13
      %s16 = sshll.u32 [#allocation2], 4
      %s17 = int_to_ptr.vmem [resolvable:$true] %s16
      %19 = dma.hbm_to_vmem [thread:$0]  %s0, 128, %s17, [#allocation3]
    $region5: #{tpu_custom_call.1} parent=1 // pred_fallthru
      _
    // Predicated region
    $region6: #{tpu_custom_call.1} parent=1 // pred_check
      _
    $region7: #{tpu_custom_call.1} parent=1 // pred_check_branch
      %21 = sbr.rel (0) target = $region9
    $region8: #{tpu_custom_call.1} parent=1 // pred_region
      %s23 = ssub.s32 8960, 8960
      %24 = vsyncadd [#allocation6], %s23
      %s25 = sshll.u32 [#allocation5], 4
      %s26 = int_to_ptr.vmem [resolvable:$true] %s25
      %31 = dma.hbm_to_vmem [thread:$0]  %s1, 8960, %s26, [#allocation6], 256, 256, 16
    $region9: #{tpu_custom_call.1} parent=1 // pred_fallthru
      _
    // Predicated region
    $region10: #{tpu_custom_call.1} parent=1 // pred_check
      _
    $region11: #{tpu_custom_call.1} parent=1 // pred_check_branch
      %33 = sbr.rel (0) target = $region13
    $region12: #{tpu_custom_call.1} parent=1 // pred_region
      %34 = dma.done [#allocation3], 128
    $region13: #{tpu_custom_call.1} parent=1 // pred_fallthru
      _
    // Predicated region
    $region14: #{tpu_custom_call.1} parent=1 // pred_check
      _
    $region15: #{tpu_custom_call.1} parent=1 // pred_check_branch
      %36 = sbr.rel (0) target = $region17
    $region16: #{tpu_custom_call.1} parent=1 // pred_region
      %37 = dma.done [#allocation6], 8960
    $region17: #{tpu_custom_call.1} parent=1 // pred_fallthru
      _
    %v38 = vld [vmem:[#allocation2] sm:$0xff]
    %v39 = vld [vmem:[#allocation5] sm:$0xff]
    %v40 = vld [vmem:[#allocation5 + $0x8] sm:$0xff]
    %v41 = vld [vmem:[#allocation5 + $0x10] sm:$0xff]
    %v42 = vld [vmem:[#allocation5 + $0x18] sm:$0xff]
    %v43 = vld [vmem:[#allocation5 + $0x20] sm:$0xff]
    %v44 = vld [vmem:[#allocation5 + $0x28] sm:$0xff]
    %v45 = vld [vmem:[#allocation5 + $0x30] sm:$0xff]
    %v46 = vld [vmem:[#allocation5 + $0x38] sm:$0xff]
    %v47 = vld [vmem:[#allocation5 + $0x40] sm:$0xff]
    %v48 = vld [vmem:[#allocation5 + $0x48] sm:$0xff]
    %v49 = vld [vmem:[#allocation5 + $0x50] sm:$0xff]
    %v50 = vld [vmem:[#allocation5 + $0x58] sm:$0xff]
    %v51 = vld [vmem:[#allocation5 + $0x60] sm:$0xff]
    %v52 = vld [vmem:[#allocation5 + $0x68] sm:$0xff]
    %v53 = vld [vmem:[#allocation5 + $0x70] sm:$0xff]
    %v54 = vld [vmem:[#allocation5 + $0x78] sm:$0xff]
    %v55 = vld [vmem:[#allocation5 + $0x80] sm:$0xff]
    %v56 = vld [vmem:[#allocation5 + $0x88] sm:$0xff]
    %v57 = vld [vmem:[#allocation5 + $0x90] sm:$0xff]
    %v58 = vld [vmem:[#allocation5 + $0x98] sm:$0xff]
    %v59 = vld [vmem:[#allocation5 + $0xa0] sm:$0xff]
    %v60 = vld [vmem:[#allocation5 + $0xa8] sm:$0xff]
    %v61 = vld [vmem:[#allocation5 + $0xb0] sm:$0xff]
    %v62 = vld [vmem:[#allocation5 + $0xb8] sm:$0xff]
    %v63 = vld [vmem:[#allocation5 + $0xc0] sm:$0xff]
    %v64 = vld [vmem:[#allocation5 + $0xc8] sm:$0xff]
    %v65 = vld [vmem:[#allocation5 + $0xd0] sm:$0xff]
    %v66 = vld [vmem:[#allocation5 + $0xd8] sm:$0xff]
    %v67 = vld [vmem:[#allocation5 + $0xe0] sm:$0xff]
    %v68 = vld [vmem:[#allocation5 + $0xe8] sm:$0xff]
    %v69 = vld [vmem:[#allocation5 + $0xf0] sm:$0xff]
    %v70 = vld [vmem:[#allocation5 + $0xf8] sm:$0xff]
    %71 = vmatprep.subr.mxu0 %v40
    %72 = vmatpush1.msra.mxu0 %v39
    %73 = vmatprep.subr.mxu0 %v42
    %74 = vmatpush1.msra.mxu0 %v41
    %75 = vmatprep.subr.mxu0 %v44
    %76 = vmatpush1.msra.mxu0 %v43
    %77 = vmatprep.subr.mxu0 %v46
    %78 = vmatpush1.msra.mxu0 %v45
    %79 = vmatprep.subr.mxu0 %v48
    %80 = vmatpush1.msra.mxu0 %v47
    %81 = vmatprep.subr.mxu0 %v50
    %82 = vmatpush1.msra.mxu0 %v49
    %83 = vmatprep.subr.mxu0 %v52
    %84 = vmatpush1.msra.mxu0 %v51
    %85 = vmatprep.subr.mxu0 %v54
    %86 = vmatpush1.msra.mxu0 %v53
    %87 = vmatprep.subr.mxu0 %v56
    %88 = vmatpush1.msra.mxu0 %v55
    %89 = vmatprep.subr.mxu0 %v58
    %90 = vmatpush1.msra.mxu0 %v57
    %91 = vmatprep.subr.mxu0 %v60
    %92 = vmatpush1.msra.mxu0 %v59
    %93 = vmatprep.subr.mxu0 %v62
    %94 = vmatpush1.msra.mxu0 %v61
    %95 = vmatprep.subr.mxu0 %v64
    %96 = vmatpush1.msra.mxu0 %v63
    %97 = vmatprep.subr.mxu0 %v66
    %98 = vmatpush1.msra.mxu0 %v65
    %99 = vmatprep.subr.mxu0 %v68
    %100 = vmatpush1.msra.mxu0 %v67
    %101 = vmatprep.subr.mxu0 %v70
    %102 = vmatpush1.msra.mxu0 %v69
    %103 = vmatprep.subr.mxu0 0.0
    %104 = vmatpush1.msra.mxu0 0.0
    %105 = vmatprep.subr.mxu0 0.0
    %106 = vmatpush1.msra.mxu0 0.0
    %107 = vmatprep.subr.mxu0 0.0
    %108 = vmatpush1.msra.mxu0 0.0
    %109 = vmatprep.subr.mxu0 0.0
    %110 = vmatpush1.msra.mxu0 0.0
    %111 = vmatprep.subr.mxu0 0.0
    %112 = vmatpush1.msra.mxu0 0.0
    %113 = vmatprep.subr.mxu0 0.0
    %114 = vmatpush1.msra.mxu0 0.0
    %115 = vmatprep.subr.mxu0 0.0
    %116 = vmatpush1.msra.mxu0 0.0
    %117 = vmatprep.subr.mxu0 0.0
    %118 = vmatpush1.msra.mxu0 0.0
    %119 = vmatprep.subr.mxu0 0.0
    %120 = vmatpush1.msra.mxu0 0.0
    %121 = vmatprep.subr.mxu0 0.0
    %122 = vmatpush1.msra.mxu0 0.0
    %123 = vmatprep.subr.mxu0 0.0
    %124 = vmatpush1.msra.mxu0 0.0
    %125 = vmatprep.subr.mxu0 0.0
    %126 = vmatpush1.msra.mxu0 0.0
    %127 = vmatprep.subr.mxu0 0.0
    %128 = vmatpush1.msra.mxu0 0.0
    %129 = vmatprep.subr.mxu0 0.0
    %130 = vmatpush1.msra.mxu0 0.0
    %131 = vmatprep.subr.mxu0 0.0
    %132 = vmatpush1.msra.mxu0 0.0
    %133 = vmatprep.subr.mxu0 0.0
    %134 = vmatpush1.msra.mxu0 0.0
    %135 = vmatprep.mubr.f32.mxu0 0.0
    %136 = vmatmul.mubr.f32.gmra.mrb[0].mxu0 %v38
    %v137 = vpop.f32.mrb[0].mxu0
    %v138 = vadd.f32 0.0, %v137
    %v139 = vpop.f32.mrb[0].mxu0
    %v140 = vadd.f32 0.0, %v139
    %141 = vdwg.mxu0
    %v142 = vand.u32 2147483647, %v138
    %vm143 = vcmask 261120
    %v144 = vsel %vm143, %v142, 0.0
    %145 = vadd.xlane.f32.xlu0 %v144
    %v146 = vpop.xlane.xlu0 %145
    %v147 = vrcp.pop 32.0
    %v148 = vmul.f32 %v146, %v147
    %v149 = vmax.f32 %v148, 1e-08
    %v150 = vrcp.pop %v149
    %v151 = vmul.f32 %v138, %v150
    %v152 = vmax.f32 %v138, 0.0
    %v153 = vld [vmem:[#allocation5 + $0x100] sm:$0xff]
    %v154 = vld [vmem:[#allocation5 + $0x110] sm:$0xff]
    %v155 = vld [vmem:[#allocation5 + $0x120] sm:$0xff]
    %v156 = vld [vmem:[#allocation5 + $0x130] sm:$0xff]
    %v157 = vld [vmem:[#allocation5 + $0x200] ss:$0 sm:$0xff]
    %v159 = vsel %vm143, %v151, 0
    %161 = vmatprep.subr.mxu0 0.0
    %162 = vmatpush1.msra.mxu0 %v153
    %163 = vmatprep.subr.mxu0 0.0
    %164 = vmatpush1.msra.mxu0 %v154
    %165 = vmatprep.subr.mxu0 0.0
    %166 = vmatpush1.msra.mxu0 %v155
    %167 = vmatprep.subr.mxu0 0.0
    %168 = vmatpush1.msra.mxu0 %v156
    %169 = vmatprep.subr.mxu0 0.0
    %170 = vmatpush1.msra.mxu0 0.0
    %171 = vmatprep.subr.mxu0 0.0
    %172 = vmatpush1.msra.mxu0 0.0
    %173 = vmatprep.subr.mxu0 0.0
    %174 = vmatpush1.msra.mxu0 0.0
    %175 = vmatprep.subr.mxu0 0.0
    %176 = vmatpush1.msra.mxu0 0.0
    %177 = vmatprep.subr.mxu0 0.0
    %178 = vmatpush1.msra.mxu0 0.0
    %179 = vmatprep.subr.mxu0 0.0
    %180 = vmatpush1.msra.mxu0 0.0
    %181 = vmatprep.subr.mxu0 0.0
    %182 = vmatpush1.msra.mxu0 0.0
    %183 = vmatprep.subr.mxu0 0.0
    %184 = vmatpush1.msra.mxu0 0.0
    %185 = vmatprep.subr.mxu0 0.0
    %186 = vmatpush1.msra.mxu0 0.0
    %187 = vmatprep.subr.mxu0 0.0
    %188 = vmatpush1.msra.mxu0 0.0
    %189 = vmatprep.subr.mxu0 0.0
    %190 = vmatpush1.msra.mxu0 0.0
    %191 = vmatprep.subr.mxu0 0.0
    %192 = vmatpush1.msra.mxu0 0.0
    %193 = vmatprep.subr.mxu0 0.0
    %194 = vmatpush1.msra.mxu0 0.0
    %195 = vmatprep.subr.mxu0 0.0
    %196 = vmatpush1.msra.mxu0 0.0
    %197 = vmatprep.subr.mxu0 0.0
    %198 = vmatpush1.msra.mxu0 0.0
    %199 = vmatprep.subr.mxu0 0.0
    %200 = vmatpush1.msra.mxu0 0.0
    %201 = vmatprep.subr.mxu0 0.0
    %202 = vmatpush1.msra.mxu0 0.0
    %203 = vmatprep.subr.mxu0 0.0
    %204 = vmatpush1.msra.mxu0 0.0
    %205 = vmatprep.subr.mxu0 0.0
    %206 = vmatpush1.msra.mxu0 0.0
    %207 = vmatprep.subr.mxu0 0.0
    %208 = vmatpush1.msra.mxu0 0.0
    %209 = vmatprep.subr.mxu0 0.0
    %210 = vmatpush1.msra.mxu0 0.0
    %211 = vmatprep.subr.mxu0 0.0
    %212 = vmatpush1.msra.mxu0 0.0
    %213 = vmatprep.subr.mxu0 0.0
    %214 = vmatpush1.msra.mxu0 0.0
    %215 = vmatprep.subr.mxu0 0.0
    %216 = vmatpush1.msra.mxu0 0.0
    %217 = vmatprep.subr.mxu0 0.0
    %218 = vmatpush1.msra.mxu0 0.0
    %219 = vmatprep.subr.mxu0 0.0
    %220 = vmatpush1.msra.mxu0 0.0
    %221 = vmatprep.subr.mxu0 0.0
    %222 = vmatpush1.msra.mxu0 0.0
    %223 = vmatprep.subr.mxu0 0.0
    %224 = vmatpush1.msra.mxu0 0.0
    %225 = vmatprep.mubr.f32.mxu0 0.0
    %226 = vmatmul.mubr.f32.gmra.mrb[0].mxu0 %v159
    %v227 = vpop.f32.mrb[0].mxu0
    %v228 = vadd.f32 %v157, %v227
    %v229 = vpop.f32.mrb[0].mxu0
    %230 = vdwg.mxu0
    %v231 = vmax.f32 %v228, 0.0
    %233 = vrot.lane.b32.xlu0 %v152, 96
    %v234 = vpop.permute.xlu0 %233
    %237 = vrot.lane.b32.xlu0 %v231, 64
    %v238 = vpop.permute.xlu0 %237
    %v240 = vsel %vm143, %v234, %v238
    %v241 = vld [vmem:[#allocation5 + $0x140] sm:$0xff]
    %v242 = vld [vmem:[#allocation5 + $0x150] sm:$0xff]
    %v243 = vld [vmem:[#allocation5 + $0x160] sm:$0xff]
    %v244 = vld [vmem:[#allocation5 + $0x170] sm:$0xff]
    %v245 = vld [vmem:[#allocation5 + $0x180] sm:$0xff]
    %v246 = vld [vmem:[#allocation5 + $0x190] sm:$0xff]
    %v247 = vld [vmem:[#allocation5 + $0x1a0] sm:$0xff]
    %v248 = vld [vmem:[#allocation5 + $0x1b0] sm:$0xff]
    %vm249 = vcmask 523264
    %v251 = vsel %vm249, %v240, 0
    %253 = vmatprep.subr.mxu0 0.0
    %254 = vmatpush1.msra.mxu0 %v241
    %255 = vmatprep.subr.mxu0 0.0
    %256 = vmatpush1.msra.mxu0 %v242
    %257 = vmatprep.subr.mxu0 0.0
    %258 = vmatpush1.msra.mxu0 %v243
    %259 = vmatprep.subr.mxu0 0.0
    %260 = vmatpush1.msra.mxu0 %v244
    %261 = vmatprep.subr.mxu0 0.0
    %262 = vmatpush1.msra.mxu0 %v245
    %263 = vmatprep.subr.mxu0 0.0
    %264 = vmatpush1.msra.mxu0 %v246
    %265 = vmatprep.subr.mxu0 0.0
    %266 = vmatpush1.msra.mxu0 %v247
    %267 = vmatprep.subr.mxu0 0.0
    %268 = vmatpush1.msra.mxu0 %v248
    %269 = vmatprep.subr.mxu0 0.0
    %270 = vmatpush1.msra.mxu0 0.0
    %271 = vmatprep.subr.mxu0 0.0
    %272 = vmatpush1.msra.mxu0 0.0
    %273 = vmatprep.subr.mxu0 0.0
    %274 = vmatpush1.msra.mxu0 0.0
    %275 = vmatprep.subr.mxu0 0.0
    %276 = vmatpush1.msra.mxu0 0.0
    %277 = vmatprep.subr.mxu0 0.0
    %278 = vmatpush1.msra.mxu0 0.0
    %279 = vmatprep.subr.mxu0 0.0
    %280 = vmatpush1.msra.mxu0 0.0
    %281 = vmatprep.subr.mxu0 0.0
    %282 = vmatpush1.msra.mxu0 0.0
    %283 = vmatprep.subr.mxu0 0.0
    %284 = vmatpush1.msra.mxu0 0.0
    %285 = vmatprep.subr.mxu0 0.0
    %286 = vmatpush1.msra.mxu0 0.0
    %287 = vmatprep.subr.mxu0 0.0
    %288 = vmatpush1.msra.mxu0 0.0
    %289 = vmatprep.subr.mxu0 0.0
    %290 = vmatpush1.msra.mxu0 0.0
    %291 = vmatprep.subr.mxu0 0.0
    %292 = vmatpush1.msra.mxu0 0.0
    %293 = vmatprep.subr.mxu0 0.0
    %294 = vmatpush1.msra.mxu0 0.0
    %295 = vmatprep.subr.mxu0 0.0
    %296 = vmatpush1.msra.mxu0 0.0
    %297 = vmatprep.subr.mxu0 0.0
    %298 = vmatpush1.msra.mxu0 0.0
    %299 = vmatprep.subr.mxu0 0.0
    %300 = vmatpush1.msra.mxu0 0.0
    %301 = vmatprep.subr.mxu0 0.0
    %302 = vmatpush1.msra.mxu0 0.0
    %303 = vmatprep.subr.mxu0 0.0
    %304 = vmatpush1.msra.mxu0 0.0
    %305 = vmatprep.subr.mxu0 0.0
    %306 = vmatpush1.msra.mxu0 0.0
    %307 = vmatprep.subr.mxu0 0.0
    %308 = vmatpush1.msra.mxu0 0.0
    %309 = vmatprep.subr.mxu0 0.0
    %310 = vmatpush1.msra.mxu0 0.0
    %311 = vmatprep.subr.mxu0 0.0
    %312 = vmatpush1.msra.mxu0 0.0
    %313 = vmatprep.subr.mxu0 0.0
    %314 = vmatpush1.msra.mxu0 0.0
    %315 = vmatprep.subr.mxu0 0.0
    %316 = vmatpush1.msra.mxu0 0.0
    %317 = vmatprep.mubr.f32.mxu0 0.0
    %318 = vmatmul.mubr.f32.gmra.mrb[0].mxu0 %v251
    %v319 = vpop.f32.mrb[0].mxu0
    %v320 = vadd.f32 0.0, %v319
    %v321 = vpop.f32.mrb[0].mxu0
    %322 = vdwg.mxu0
    %v323 = vadd.f32 %v320, %v228
    %v324 = vld [vmem:[#allocation5 + $0x210] ss:$0 sm:$0xff]
    %326 = vrot.lane.b32.xlu0 %v324, 96
    %v327 = vpop.permute.xlu0 %326
    %v329 = vadd.f32 %v320, %v327
    %331 = vrot.lane.b32.xlu0 %v138, 64
    %v332 = vpop.permute.xlu0 %331
    %v334 = vadd.f32 %v323, %v332
    %v335 = vxor.u32 %v334, 2147483648
    %v336 = vmul.f32 %v335, 1.442695
    %v337 = vpow.pop %v336
    %v338 = vadd.f32 %v337, 1.0
    %v339 = vrcp.pop %v338
    %v340 = vmul.f32 1.0, %v339
    %v341 = vmul.f32 %v340, %v140
    %343 = vrot.lane.b32.xlu0 %v341, 64
    %v344 = vpop.permute.xlu0 %343
    %v346 = vadd.f32 %v323, %v344
    %v347 = vtanh.pop %v346
    %v348 = vsub.f32 1.0, %v340
    %350 = vrot.lane.b32.xlu0 %v347, 96
    %v351 = vpop.permute.xlu0 %350
    %v353 = vmul.f32 %v348, %v351
    %355 = vrot.lane.b32.xlu0 %v38, 120
    %v356 = vpop.permute.xlu0 %355
    %v358 = vmul.f32 %v340, %v356
    %v359 = vadd.f32 %v353, %v358
    %v360 = vld [vmem:[#allocation5 + $0x1c0] sm:$0xff]
    %v361 = vld [vmem:[#allocation5 + $0x1d0] sm:$0xff]
    %v362 = vld [vmem:[#allocation5 + $0x1e0] sm:$0xff]
    %v363 = vld [vmem:[#allocation5 + $0x1f0] sm:$0xff]
    %v364 = vld [vmem:[#allocation5 + $0x220] ss:$0 sm:$0xff]
    %366 = vrot.lane.b32.xlu0 %v359, 96
    %v367 = vpop.permute.xlu0 %366
    %v368 = vsel %vm143, %v367, 0
    %370 = vmatprep.subr.mxu0 0.0
    %371 = vmatpush1.msra.mxu0 %v360
    %372 = vmatprep.subr.mxu0 0.0
    %373 = vmatpush1.msra.mxu0 %v361
    %374 = vmatprep.subr.mxu0 0.0
    %375 = vmatpush1.msra.mxu0 %v362
    %376 = vmatprep.subr.mxu0 0.0
    %377 = vmatpush1.msra.mxu0 %v363
    %378 = vmatprep.subr.mxu0 0.0
    %379 = vmatpush1.msra.mxu0 0.0
    %380 = vmatprep.subr.mxu0 0.0
    %381 = vmatpush1.msra.mxu0 0.0
    %382 = vmatprep.subr.mxu0 0.0
    %383 = vmatpush1.msra.mxu0 0.0
    %384 = vmatprep.subr.mxu0 0.0
    %385 = vmatpush1.msra.mxu0 0.0
    %386 = vmatprep.subr.mxu0 0.0
    %387 = vmatpush1.msra.mxu0 0.0
    %388 = vmatprep.subr.mxu0 0.0
    %389 = vmatpush1.msra.mxu0 0.0
    %390 = vmatprep.subr.mxu0 0.0
    %391 = vmatpush1.msra.mxu0 0.0
    %392 = vmatprep.subr.mxu0 0.0
    %393 = vmatpush1.msra.mxu0 0.0
    %394 = vmatprep.subr.mxu0 0.0
    %395 = vmatpush1.msra.mxu0 0.0
    %396 = vmatprep.subr.mxu0 0.0
    %397 = vmatpush1.msra.mxu0 0.0
    %398 = vmatprep.subr.mxu0 0.0
    %399 = vmatpush1.msra.mxu0 0.0
    %400 = vmatprep.subr.mxu0 0.0
    %401 = vmatpush1.msra.mxu0 0.0
    %402 = vmatprep.subr.mxu0 0.0
    %403 = vmatpush1.msra.mxu0 0.0
    %404 = vmatprep.subr.mxu0 0.0
    %405 = vmatpush1.msra.mxu0 0.0
    %406 = vmatprep.subr.mxu0 0.0
    %407 = vmatpush1.msra.mxu0 0.0
    %408 = vmatprep.subr.mxu0 0.0
    %409 = vmatpush1.msra.mxu0 0.0
    %410 = vmatprep.subr.mxu0 0.0
    %411 = vmatpush1.msra.mxu0 0.0
    %412 = vmatprep.subr.mxu0 0.0
    %413 = vmatpush1.msra.mxu0 0.0
    %414 = vmatprep.subr.mxu0 0.0
    %415 = vmatpush1.msra.mxu0 0.0
    %416 = vmatprep.subr.mxu0 0.0
    %417 = vmatpush1.msra.mxu0 0.0
    %418 = vmatprep.subr.mxu0 0.0
    %419 = vmatpush1.msra.mxu0 0.0
    %420 = vmatprep.subr.mxu0 0.0
    %421 = vmatpush1.msra.mxu0 0.0
    %422 = vmatprep.subr.mxu0 0.0
    %423 = vmatpush1.msra.mxu0 0.0
    %424 = vmatprep.subr.mxu0 0.0
    %425 = vmatpush1.msra.mxu0 0.0
    %426 = vmatprep.subr.mxu0 0.0
    %427 = vmatpush1.msra.mxu0 0.0
    %428 = vmatprep.subr.mxu0 0.0
    %429 = vmatpush1.msra.mxu0 0.0
    %430 = vmatprep.subr.mxu0 0.0
    %431 = vmatpush1.msra.mxu0 0.0
    %432 = vmatprep.subr.mxu0 0.0
    %433 = vmatpush1.msra.mxu0 0.0
    %434 = vmatprep.mubr.f32.mxu0 0.0
    %435 = vmatmul.mubr.f32.gmra.mrb[0].mxu0 %v368
    %v436 = vpop.f32.mrb[0].mxu0
    %v437 = vadd.f32 %v364, %v436
    %v438 = vpop.f32.mrb[0].mxu0
    %439 = vdwg.mxu0
    %441 = vrot.lane.b32.xlu0 %v329, 32
    %v442 = vpop.permute.xlu0 %441
    %445 = vrot.lane.b32.xlu0 %v437, 64
    %v446 = vpop.permute.xlu0 %445
    %v448 = vsel %vm143, %v442, %v359
    %v449 = vsel %vm249, %v448, %v446
    %450 = vst [vmem:[#allocation7] sm:$0xff] %v449
    // Predicated region
    $region18: #{tpu_custom_call.1} parent=1 // pred_check
      _
    $region19: #{tpu_custom_call.1} parent=1 // pred_check_branch
      %452 = sbr.rel (0) target = $region21
    $region20: #{tpu_custom_call.1} parent=1 // pred_region
      %s454 = ssub.s32 128, 128
      %455 = vsyncadd [#allocation4], %s454
      %s457 = sshll.u32 [#allocation7], 4
      %s458 = int_to_ptr.vmem [resolvable:$true] %s457
      %460 = dma.vmem_to_hbm [thread:$0]  %s458, 128, %s2, [#allocation4]
    $region21: #{tpu_custom_call.1} parent=1 // pred_fallthru
      _
    // Predicated region
    $region22: #{tpu_custom_call.1} parent=1 // pred_check
      _
    $region23: #{tpu_custom_call.1} parent=1 // pred_check_branch
      %462 = sbr.rel (0) target = $region25
    $region24: #{tpu_custom_call.1} parent=1 // pred_region
      %463 = dma.done [#allocation4], 128
    $region25: #{tpu_custom_call.1} parent=1 // pred_fallthru
      _
    %464 = vsyncpa [#allocation3], 1
    %465 = vsyncpa [#allocation6], 1
    %466 = vsyncpa [#allocation4], 1

</llo_original>
